<compile_context>
chip_gen: v7x
topology: tpu7x:2x2x1
jax: 0.10.0
libtpu: 0.0.40
codegen_flags: <defaults>
</compile_context>

<pallas_src>
import functools

import jax
import jax.numpy as jnp
from jax.experimental import pallas as pl
from jax.experimental.pallas import tpu as pltpu


def _round_up(x, m):
    return ((x + m - 1) // m) * m


def _device_kind():
    try:
        return jax.devices()[0].device_kind.lower()
    except Exception:
        return ""


def _pick_tb(batch):
    """Batch tile: big enough to amortize per-step overhead, VMEM-safe."""
    kind = _device_kind()
    tb = 1024 if "v5" in kind else 2048          # v5e: stay inside 16 MiB scoped VMEM
    tb = min(tb, _round_up(batch, 8))            # never exceed the (padded) batch
    # v7x has 2 TensorCores: keep >= 2 grid steps so "parallel" shards them.
    if ("v7" in kind or "7x" in kind) and batch > 8:
        tb = min(tb, _round_up(pl.cdiv(batch, 2), 8))
    return max(tb, 8)


def _mlp_kernel(f_ref, l_ref, w1f_ref, w1l_ref, b1_ref,
                w2_ref, b2_ref, w3_ref, b3_ref, o_ref):
    """One batch tile of the 3-layer MLP. Weights stay VMEM-resident."""
    # No-op casts when the producer already feeds bf16 (preferred).
    f = f_ref[...].astype(jnp.bfloat16)                        # (TB, input_dim)
    l = l_ref[...].astype(jnp.bfloat16)                        # (TB, lyrics_dim)

    # Layer 1: in-kernel "concat" == split matmul into one f32 accumulator.
    h1 = jnp.dot(f, w1f_ref[...], preferred_element_type=jnp.float32)
    h1 = h1 + jnp.dot(l, w1l_ref[...], preferred_element_type=jnp.float32)
    h1 = jnp.maximum(h1 + b1_ref[...], 0.0)                    # ReLU, (TB, 512)
    # Dropout(0.3): identity at inference time.

    # Layer 2
    h2 = jnp.dot(h1.astype(jnp.bfloat16), w2_ref[...],
                 preferred_element_type=jnp.float32)
    h2 = jnp.maximum(h2 + b2_ref[...], 0.0)                    # (TB, 256)

    # Layer 3 (output width padded to 128 lanes -> lane-dense bf16 store)
    o = jnp.dot(h2.astype(jnp.bfloat16), w3_ref[...],
                preferred_element_type=jnp.float32)
    o_ref[...] = (o + b3_ref[...]).astype(o_ref.dtype)         # (TB, out_pad) bf16


@functools.partial(jax.jit, static_argnames=("tb",))
def _forward_padded(features, lyrics_embedding, params, *, tb):
    """Returns the padded (b_pad, out_pad) bf16 output (no extra slice pass)."""
    B, input_dim = features.shape
    _, lyrics_dim = lyrics_embedding.shape
    out_pad = params["w3"].shape[1]                            # multiple of 128

    b_pad = _round_up(B, tb)
    if b_pad != B:
        pad = b_pad - B
        features = jnp.pad(features, ((0, pad), (0, 0)))
        lyrics_embedding = jnp.pad(lyrics_embedding, ((0, pad), (0, 0)))

    grid = (b_pad // tb,)
    act = lambda d: pl.BlockSpec((tb, d), lambda i: (i, 0))            # batch-tiled
    res = lambda r, c: pl.BlockSpec((r, c), lambda i: (0, 0))          # VMEM-resident

    return pl.pallas_call(
        _mlp_kernel,
        out_shape=jax.ShapeDtypeStruct((b_pad, out_pad), jnp.bfloat16),
        grid=grid,
        in_specs=[
            act(input_dim), act(lyrics_dim),
            res(input_dim, 512), res(lyrics_dim, 512), res(1, 512),
            res(512, 256), res(1, 256),
            res(256, out_pad), res(1, out_pad),
        ],
        out_specs=act(out_pad),
        compiler_params=pltpu.CompilerParams(
            dimension_semantics=("parallel",)),
    )(
        features, lyrics_embedding,
        params["w1f"], params["w1l"], params["b1"],
        params["w2"], params["b2"],
        params["w3"], params["b3"],
    )


def recommender_forward(features, lyrics_embedding, params, *, tb=None):
    """features: (B, input_dim), lyrics_embedding: (B, lyrics_dim); bf16 preferred.

    Returns the padded (b_pad, out_pad) bf16 output; the valid region is
    out[:B, :input_dim]. Slicing is left to the downstream consumer so no
    extra full-array HBM copy pass is emitted next to the kernel.
    """
    if tb is None:
        tb = _pick_tb(features.shape[0])
    return _forward_padded(features, lyrics_embedding, params, tb=tb)


def init_params(key, input_dim, lyrics_dim):
    """PyTorch-style U(-1/sqrt(fan_in), +1/sqrt(fan_in)) init.

    Weights are stored pre-transposed as (in, out) in bf16 (MXU operand
    dtype); biases are (1, out) f32. w1 is stored split along its input rows
    into the `features` part (w1f) and the `lyrics` part (w1l). The last
    layer is zero-padded along its output dim to a multiple of 128 lanes.
    """
    combined_dim = input_dim + lyrics_dim
    out_pad = _round_up(input_dim, 128)

    def uniform(k, shape, bound):
        return jax.random.uniform(k, shape, jnp.float32, -bound, bound)

    k1w, k1b, k2w, k2b, k3w, k3b = jax.random.split(key, 6)

    bound1 = combined_dim ** -0.5
    w1 = uniform(k1w, (combined_dim, 512), bound1)
    bound2 = 512 ** -0.5
    bound3 = 256 ** -0.5
    w3 = uniform(k3w, (256, input_dim), bound3)
    b3 = uniform(k3b, (1, input_dim), bound3)

    return {
        "w1f": w1[:input_dim].astype(jnp.bfloat16),
        "w1l": w1[input_dim:].astype(jnp.bfloat16),
        "b1": uniform(k1b, (1, 512), bound1),
        "w2": uniform(k2w, (512, 256), bound2).astype(jnp.bfloat16),
        "b2": uniform(k2b, (1, 256), bound2),
        "w3": jnp.pad(w3, ((0, 0), (0, out_pad - input_dim))).astype(jnp.bfloat16),
        "b3": jnp.pad(b3, ((0, 0), (0, out_pad - input_dim))),
    }


def _reference(features, lyrics, params):
    """Pure-JAX reference using the same bf16-operand / f32-accumulate math."""
    input_dim = features.shape[1]
    f = features.astype(jnp.bfloat16)
    l = lyrics.astype(jnp.bfloat16)
    h1 = (jnp.dot(f, params["w1f"], preferred_element_type=jnp.float32)
          + jnp.dot(l, params["w1l"], preferred_element_type=jnp.float32))
    h1 = jnp.maximum(h1 + params["b1"], 0.0)
    h2 = jnp.dot(h1.astype(jnp.bfloat16), params["w2"],
                 preferred_element_type=jnp.float32)
    h2 = jnp.maximum(h2 + params["b2"], 0.0)
    o = jnp.dot(h2.astype(jnp.bfloat16), params["w3"],
                preferred_element_type=jnp.float32) + params["b3"]
    return o[:, :input_dim]


if __name__ == "__main__":
    # Small shapes consistent with the module: batch=8, input_dim=16,
    # lyrics_dim=112 -> combined_dim = 128.
    B, INPUT_DIM, LYRICS_DIM = 8, 16, 112

    key = jax.random.PRNGKey(0)
    kp, kf, kl = jax.random.split(key, 3)

    params = init_params(kp, INPUT_DIM, LYRICS_DIM)
    # Producer emits bf16 directly (halves input DMA; no extra wrapper cast pass).
    features = jax.random.normal(kf, (B, INPUT_DIM), jnp.float32).astype(jnp.bfloat16)
    lyrics = jax.random.normal(kl, (B, LYRICS_DIM), jnp.float32).astype(jnp.bfloat16)

    out_padded = recommender_forward(features, lyrics, params)
    out_padded = jax.block_until_ready(out_padded)

    # Downstream consumer extracts the valid region.
    out = out_padded[:B, :INPUT_DIM].astype(jnp.float32)
    assert out.shape == (B, INPUT_DIM)

    ref = _reference(features, lyrics, params)
    assert jnp.allclose(out, ref, atol=2e-2, rtol=2e-2), "mismatch vs reference"

    print("KERNEL_OK")
</pallas_src>

<mosaic_0001>
module attributes {stable_mosaic.version = 11 : i64} {
  func.func @_mlp_kernel(%arg0: i32, %arg1: memref<8x16xbf16, #tpu.memory_space<vmem>>, %arg2: memref<8x112xbf16, #tpu.memory_space<vmem>>, %arg3: memref<16x512xbf16, #tpu.memory_space<vmem>>, %arg4: memref<112x512xbf16, #tpu.memory_space<vmem>>, %arg5: memref<1x512xf32, #tpu.memory_space<vmem>>, %arg6: memref<512x256xbf16, #tpu.memory_space<vmem>>, %arg7: memref<1x256xf32, #tpu.memory_space<vmem>>, %arg8: memref<256x128xbf16, #tpu.memory_space<vmem>>, %arg9: memref<1x128xf32, #tpu.memory_space<vmem>>, %arg10: memref<8x128xbf16, #tpu.memory_space<vmem>>) attributes {dimension_semantics = [#tpu.dimension_semantics<parallel>], iteration_bounds = array<i64: 1>, scalar_prefetch = 0 : i64, scratch_operands = 0 : i64, tpu.core_type = #tpu.core_type<tc>, window_params = [{transform_indices = @transform_0, window_bounds = array<i64: 8, 16>}, {transform_indices = @transform_1, window_bounds = array<i64: 8, 112>}, {pipeline_mode = #tpu.pipeline_mode<synchronous>, transform_indices = @transform_2, window_bounds = array<i64: 16, 512>}, {pipeline_mode = #tpu.pipeline_mode<synchronous>, transform_indices = @transform_3, window_bounds = array<i64: 112, 512>}, {pipeline_mode = #tpu.pipeline_mode<synchronous>, transform_indices = @transform_4, window_bounds = array<i64: 1, 512>}, {pipeline_mode = #tpu.pipeline_mode<synchronous>, transform_indices = @transform_5, window_bounds = array<i64: 512, 256>}, {pipeline_mode = #tpu.pipeline_mode<synchronous>, transform_indices = @transform_6, window_bounds = array<i64: 1, 256>}, {pipeline_mode = #tpu.pipeline_mode<synchronous>, transform_indices = @transform_7, window_bounds = array<i64: 256, 128>}, {pipeline_mode = #tpu.pipeline_mode<synchronous>, transform_indices = @transform_8, window_bounds = array<i64: 1, 128>}, {transform_indices = @transform_9, window_bounds = array<i64: 8, 128>}]} {
    %c0 = arith.constant 0 : index
    %c0_0 = arith.constant 0 : index
    %0 = vector.load %arg1[%c0, %c0_0] : memref<8x16xbf16, #tpu.memory_space<vmem>>, vector<8x16xbf16>
    %c0_1 = arith.constant 0 : index
    %c0_2 = arith.constant 0 : index
    %1 = vector.load %arg2[%c0_1, %c0_2] : memref<8x112xbf16, #tpu.memory_space<vmem>>, vector<8x112xbf16>
    %c0_3 = arith.constant 0 : index
    %c0_4 = arith.constant 0 : index
    %2 = vector.load %arg3[%c0_3, %c0_4] : memref<16x512xbf16, #tpu.memory_space<vmem>>, vector<16x512xbf16>
    %cst = arith.constant dense<0.000000e+00> : vector<8x512xf32>
    %3 = tpu.matmul %0, %2, %cst {dimension_numbers = #tpu.dot_dimension_numbers<[1], [0], [0], [1], [0, 0, 1, 1], [], []>} : vector<8x16xbf16>, vector<16x512xbf16>, vector<8x512xf32> -> vector<8x512xf32>
    %c0_5 = arith.constant 0 : index
    %c0_6 = arith.constant 0 : index
    %4 = vector.load %arg4[%c0_5, %c0_6] : memref<112x512xbf16, #tpu.memory_space<vmem>>, vector<112x512xbf16>
    %cst_7 = arith.constant dense<0.000000e+00> : vector<8x512xf32>
    %5 = tpu.matmul %1, %4, %cst_7 {dimension_numbers = #tpu.dot_dimension_numbers<[1], [0], [0], [1], [0, 0, 1, 1], [], []>} : vector<8x112xbf16>, vector<112x512xbf16>, vector<8x512xf32> -> vector<8x512xf32>
    %6 = arith.addf %3, %5 : vector<8x512xf32>
    %c0_8 = arith.constant 0 : index
    %c0_9 = arith.constant 0 : index
    %7 = vector.load %arg5[%c0_8, %c0_9] : memref<1x512xf32, #tpu.memory_space<vmem>>, vector<1x512xf32>
    %8 = vector.broadcast %7 : vector<1x512xf32> to vector<8x512xf32>
    %9 = arith.addf %6, %8 : vector<8x512xf32>
    %cst_10 = arith.constant 0.000000e+00 : f32
    %10 = vector.broadcast %cst_10 : f32 to vector<8x512xf32>
    %11 = arith.maximumf %9, %10 : vector<8x512xf32>
    %12 = arith.truncf %11 : vector<8x512xf32> to vector<8x512xbf16>
    %c0_11 = arith.constant 0 : index
    %c0_12 = arith.constant 0 : index
    %13 = vector.load %arg6[%c0_11, %c0_12] : memref<512x256xbf16, #tpu.memory_space<vmem>>, vector<512x256xbf16>
    %cst_13 = arith.constant dense<0.000000e+00> : vector<8x256xf32>
    %14 = tpu.matmul %12, %13, %cst_13 {dimension_numbers = #tpu.dot_dimension_numbers<[1], [0], [0], [1], [0, 0, 1, 1], [], []>} : vector<8x512xbf16>, vector<512x256xbf16>, vector<8x256xf32> -> vector<8x256xf32>
    %c0_14 = arith.constant 0 : index
    %c0_15 = arith.constant 0 : index
    %15 = vector.load %arg7[%c0_14, %c0_15] : memref<1x256xf32, #tpu.memory_space<vmem>>, vector<1x256xf32>
    %16 = vector.broadcast %15 : vector<1x256xf32> to vector<8x256xf32>
    %17 = arith.addf %14, %16 : vector<8x256xf32>
    %cst_16 = arith.constant 0.000000e+00 : f32
    %18 = vector.broadcast %cst_16 : f32 to vector<8x256xf32>
    %19 = arith.maximumf %17, %18 : vector<8x256xf32>
    %20 = arith.truncf %19 : vector<8x256xf32> to vector<8x256xbf16>
    %c0_17 = arith.constant 0 : index
    %c0_18 = arith.constant 0 : index
    %21 = vector.load %arg8[%c0_17, %c0_18] : memref<256x128xbf16, #tpu.memory_space<vmem>>, vector<256x128xbf16>
    %cst_19 = arith.constant dense<0.000000e+00> : vector<8x128xf32>
    %22 = tpu.matmul %20, %21, %cst_19 {dimension_numbers = #tpu.dot_dimension_numbers<[1], [0], [0], [1], [0, 0, 1, 1], [], []>} : vector<8x256xbf16>, vector<256x128xbf16>, vector<8x128xf32> -> vector<8x128xf32>
    %c0_20 = arith.constant 0 : index
    %c0_21 = arith.constant 0 : index
    %23 = vector.load %arg9[%c0_20, %c0_21] : memref<1x128xf32, #tpu.memory_space<vmem>>, vector<1x128xf32>
    %24 = vector.broadcast %23 : vector<1x128xf32> to vector<8x128xf32>
    %25 = arith.addf %22, %24 : vector<8x128xf32>
    %26 = arith.truncf %25 : vector<8x128xf32> to vector<8x128xbf16>
    %c0_22 = arith.constant 0 : index
    %c0_23 = arith.constant 0 : index
    %27 = vector.load %arg10[%c0_22, %c0_23] : memref<8x128xbf16, #tpu.memory_space<vmem>>, vector<8x128xbf16>
    tpu.vector_store %arg10[%c0_22, %c0_23], %26 {strides = array<i32>} : memref<8x128xbf16, #tpu.memory_space<vmem>>, vector<8x128xbf16>,
    return
  }
  func.func @transform_0(%arg0: i32) -> (i32, i32) {
    %c0_i32 = arith.constant 0 : i32
    %c0_i32_0 = arith.constant 0 : i32
    return %arg0, %c0_i32 : i32, i32
  }
  func.func @transform_1(%arg0: i32) -> (i32, i32) {
    %c0_i32 = arith.constant 0 : i32
    %c0_i32_0 = arith.constant 0 : i32
    return %arg0, %c0_i32 : i32, i32
  }
  func.func @transform_2(%arg0: i32) -> (i32, i32) {
    %c0_i32 = arith.constant 0 : i32
    %c0_i32_0 = arith.constant 0 : i32
    %c0_i32_1 = arith.constant 0 : i32
    return %c0_i32, %c0_i32_0 : i32, i32
  }
  func.func @transform_3(%arg0: i32) -> (i32, i32) {
    %c0_i32 = arith.constant 0 : i32
    %c0_i32_0 = arith.constant 0 : i32
    %c0_i32_1 = arith.constant 0 : i32
    return %c0_i32, %c0_i32_0 : i32, i32
  }
  func.func @transform_4(%arg0: i32) -> (i32, i32) {
    %c0_i32 = arith.constant 0 : i32
    %c0_i32_0 = arith.constant 0 : i32
    %c0_i32_1 = arith.constant 0 : i32
    return %c0_i32, %c0_i32_0 : i32, i32
  }
  func.func @transform_5(%arg0: i32) -> (i32, i32) {
    %c0_i32 = arith.constant 0 : i32
    %c0_i32_0 = arith.constant 0 : i32
    %c0_i32_1 = arith.constant 0 : i32
    return %c0_i32, %c0_i32_0 : i32, i32
  }
  func.func @transform_6(%arg0: i32) -> (i32, i32) {
    %c0_i32 = arith.constant 0 : i32
    %c0_i32_0 = arith.constant 0 : i32
    %c0_i32_1 = arith.constant 0 : i32
    return %c0_i32, %c0_i32_0 : i32, i32
  }
  func.func @transform_7(%arg0: i32) -> (i32, i32) {
    %c0_i32 = arith.constant 0 : i32
    %c0_i32_0 = arith.constant 0 : i32
    %c0_i32_1 = arith.constant 0 : i32
    return %c0_i32, %c0_i32_0 : i32, i32
  }
  func.func @transform_8(%arg0: i32) -> (i32, i32) {
    %c0_i32 = arith.constant 0 : i32
    %c0_i32_0 = arith.constant 0 : i32
    %c0_i32_1 = arith.constant 0 : i32
    return %c0_i32, %c0_i32_0 : i32, i32
  }
  func.func @transform_9(%arg0: i32) -> (i32, i32) {
    %c0_i32 = arith.constant 0 : i32
    %c0_i32_0 = arith.constant 0 : i32
    return %arg0, %c0_i32 : i32, i32
  }
}

</mosaic_0001>

<llo_original>
// kernel: _forward_padded.1
$region0: #{_forward_padded.1}
  #allocation0 [shape = 'u32[]', space=smem, size = 0x4, offset = 0x4, fixed_abs, tag = 'smem constant byte address 0x4 - core index']
  #allocation1 [shape = 'u32[144,128]{1,0:T(1,128)}', space=vmem, size = 0x12000, scoped, tag = 'internal scratch']
  %s0 = inlined_call_operand.hbm [shape: bf16[8,16], index: 0, kind: input, shape index: {}]
  %s1 = inlined_call_operand.hbm [shape: bf16[8,112], index: 1, kind: input, shape index: {}]
  %s2 = inlined_call_operand.hbm [shape: bf16[16,512], index: 2, kind: input, shape index: {}]
  %s3 = inlined_call_operand.hbm [shape: bf16[112,512], index: 3, kind: input, shape index: {}]
  %s4 = inlined_call_operand.vmem [shape: f32[1,512], index: 4, kind: input, shape index: {}]
  %s5 = inlined_call_operand.hbm [shape: bf16[512,256], index: 5, kind: input, shape index: {}]
  %s6 = inlined_call_operand.vmem [shape: f32[1,256], index: 6, kind: input, shape index: {}]
  %s7 = inlined_call_operand.hbm [shape: bf16[256,128], index: 7, kind: input, shape index: {}]
  %s8 = inlined_call_operand.vmem [shape: f32[1,128], index: 8, kind: input, shape index: {}]
  %s9 = inlined_call_operand.hbm [shape: bf16[8,128], index: 9, kind: output, shape index: {}]
  %s10 = sld [smem:[#allocation0]]
  $region70: #{_forward_padded.1} parent=0
    _
  %s12 = ssub.s32 1, %s10
  %s13 = scalar_select 0, %s12, %s10
  $region1: #{_forward_padded.1} parent=0
    #allocation2 [shape = 'u8[2048]{0}', space=vmem, size = 0x800, scoped, tag = 'input window, operand 0, single buffered']
    #allocation3 [shape = 's32[1]{0}', space=sflag, size = 0x4, scoped, tag = 'scoped memory for _forward_padded.1']
    #allocation4 [shape = 's32[1]{0}', space=sflag, size = 0x4, scoped, tag = 'scoped memory for _forward_padded.1']
    #allocation5 [shape = 'u8[2048]{0}', space=vmem, size = 0x800, scoped, tag = 'input window, operand 1, single buffered']
    #allocation6 [shape = 's32[1]{0}', space=sflag, size = 0x4, scoped, tag = 'scoped memory for _forward_padded.1']
    #allocation7 [shape = 'u8[16384]{0}', space=vmem, size = 0x4000, scoped, tag = 'input window, operand 2, single buffered']
    #allocation8 [shape = 'u8[114688]{0}', space=vmem, size = 0x1c000, scoped, tag = 'input window, operand 3, single buffered']
    #allocation9 [shape = 's32[1]{0}', space=sflag, size = 0x4, scoped, tag = 'scoped memory for _forward_padded.1']
    #allocation10 [shape = 'u8[262144]{0}', space=vmem, size = 0x40000, scoped, tag = 'input window, operand 5, single buffered']
    #allocation11 [shape = 'u8[65536]{0}', space=vmem, size = 0x10000, scoped, tag = 'input window, operand 7, single buffered']
    #allocation12 [shape = 's32[1]{0}', space=sflag, size = 0x4, scoped, tag = 'scoped memory for _forward_padded.1']
    #allocation13 [shape = 'u8[2048]{0}', space=vmem, size = 0x800, scoped, tag = 'output window, operand 0, single buffered']
    %14 = vsyncpa [#allocation3], 0
    %15 = vsyncpa [#allocation6], 0
    %16 = vsyncpa [#allocation9], 0
    %17 = vsyncpa [#allocation12], 0
    %18 = vsyncpa [#allocation4], 0
    // Predicated region
    $region2: #{_forward_padded.1} parent=1 // pred_check
      _
    $region3: #{_forward_padded.1} parent=1 // pred_check_branch
      %20 = sbr.rel (0) target = $region5
    $region4: #{_forward_padded.1} parent=1 // pred_region
      %s22 = ssub.s32 64, 64
      %23 = vsyncadd [#allocation3], %s22
      %s25 = sshll.u32 [#allocation2], 4
      %s26 = int_to_ptr.vmem [resolvable:$true] %s25
      %28 = dma.hbm_to_vmem [thread:$0]  %s0, 64, %s26, [#allocation3]
    $region5: #{_forward_padded.1} parent=1 // pred_fallthru
      _
    // Predicated region
    $region6: #{_forward_padded.1} parent=1 // pred_check
      _
    $region7: #{_forward_padded.1} parent=1 // pred_check_branch
      %30 = sbr.rel (0) target = $region9
    $region8: #{_forward_padded.1} parent=1 // pred_region
      %s32 = ssub.s32 64, 64
      %33 = vsyncadd [#allocation6], %s32
      %s35 = sshll.u32 [#allocation5], 4
      %s36 = int_to_ptr.vmem [resolvable:$true] %s35
      %38 = dma.hbm_to_vmem [thread:$0]  %s1, 64, %s36, [#allocation6]
    $region9: #{_forward_padded.1} parent=1 // pred_fallthru
      _
    // Predicated region
    $region10: #{_forward_padded.1} parent=1 // pred_check
      _
    $region11: #{_forward_padded.1} parent=1 // pred_check_branch
      %40 = sbr.rel (0) target = $region13
    $region12: #{_forward_padded.1} parent=1 // pred_region
      %s42 = ssub.s32 512, 512
      %43 = vsyncadd [#allocation6], %s42
      %s44 = sshll.u32 [#allocation7], 4
      %s45 = int_to_ptr.vmem [resolvable:$true] %s44
      %50 = dma.hbm_to_vmem [thread:$0]  %s2, 512, %s45, [#allocation6], 256, 256, 16
    $region13: #{_forward_padded.1} parent=1 // pred_fallthru
      _
    // Predicated region
    $region14: #{_forward_padded.1} parent=1 // pred_check
      _
    $region15: #{_forward_padded.1} parent=1 // pred_check_branch
      %52 = sbr.rel (0) target = $region17
    $region16: #{_forward_padded.1} parent=1 // pred_region
      %s54 = ssub.s32 3584, 3584
      %55 = vsyncadd [#allocation9], %s54
      %s56 = sshll.u32 [#allocation8], 4
      %s57 = int_to_ptr.vmem [resolvable:$true] %s56
      %62 = dma.hbm_to_vmem [thread:$0]  %s3, 3584, %s57, [#allocation9], 256, 256, 16
    $region17: #{_forward_padded.1} parent=1 // pred_fallthru
      _
    // Predicated region
    $region18: #{_forward_padded.1} parent=1 // pred_check
      _
    $region19: #{_forward_padded.1} parent=1 // pred_check_branch
      %64 = sbr.rel (0) target = $region21
    $region20: #{_forward_padded.1} parent=1 // pred_region
      _
    $region21: #{_forward_padded.1} parent=1 // pred_fallthru
      _
    // Predicated region
    $region22: #{_forward_padded.1} parent=1 // pred_check
      _
    $region23: #{_forward_padded.1} parent=1 // pred_check_branch
      %66 = sbr.rel (0) target = $region25
    $region24: #{_forward_padded.1} parent=1 // pred_region
      %s68 = ssub.s32 8192, 8192
      %69 = vsyncadd [#allocation9], %s68
      %s70 = sshll.u32 [#allocation10], 4
      %s71 = int_to_ptr.vmem [resolvable:$true] %s70
      %76 = dma.hbm_to_vmem [thread:$0]  %s5, 8192, %s71, [#allocation9], 128, 128, 8
    $region25: #{_forward_padded.1} parent=1 // pred_fallthru
      _
    // Predicated region
    $region26: #{_forward_padded.1} parent=1 // pred_check
      _
    $region27: #{_forward_padded.1} parent=1 // pred_check_branch
      %78 = sbr.rel (0) target = $region29
    $region28: #{_forward_padded.1} parent=1 // pred_region
      _
    $region29: #{_forward_padded.1} parent=1 // pred_fallthru
      _
    // Predicated region
    $region30: #{_forward_padded.1} parent=1 // pred_check
      _
    $region31: #{_forward_padded.1} parent=1 // pred_check_branch
      %80 = sbr.rel (0) target = $region33
    $region32: #{_forward_padded.1} parent=1 // pred_region
      %s82 = ssub.s32 2048, 2048
      %83 = vsyncadd [#allocation12], %s82
      %s84 = sshll.u32 [#allocation11], 4
      %s85 = int_to_ptr.vmem [resolvable:$true] %s84
      %90 = dma.hbm_to_vmem [thread:$0]  %s7, 2048, %s85, [#allocation12], 64, 64, 4
    $region33: #{_forward_padded.1} parent=1 // pred_fallthru
      _
    // Predicated region
    $region34: #{_forward_padded.1} parent=1 // pred_check
      _
    $region35: #{_forward_padded.1} parent=1 // pred_check_branch
      %92 = sbr.rel (0) target = $region37
    $region36: #{_forward_padded.1} parent=1 // pred_region
      _
    $region37: #{_forward_padded.1} parent=1 // pred_fallthru
      _
    // Predicated region
    $region38: #{_forward_padded.1} parent=1 // pred_check
      _
    $region39: #{_forward_padded.1} parent=1 // pred_check_branch
      %94 = sbr.rel (0) target = $region41
    $region40: #{_forward_padded.1} parent=1 // pred_region
      %95 = dma.done [#allocation3], 64
    $region41: #{_forward_padded.1} parent=1 // pred_fallthru
      _
    // Predicated region
    $region42: #{_forward_padded.1} parent=1 // pred_check
      _
    $region43: #{_forward_padded.1} parent=1 // pred_check_branch
      %97 = sbr.rel (0) target = $region45
    $region44: #{_forward_padded.1} parent=1 // pred_region
      %98 = dma.done [#allocation6], 64
    $region45: #{_forward_padded.1} parent=1 // pred_fallthru
      _
    // Predicated region
    $region46: #{_forward_padded.1} parent=1 // pred_check
      _
    $region47: #{_forward_padded.1} parent=1 // pred_check_branch
      %100 = sbr.rel (0) target = $region49
    $region48: #{_forward_padded.1} parent=1 // pred_region
      %101 = dma.done [#allocation6], 512
    $region49: #{_forward_padded.1} parent=1 // pred_fallthru
      _
    // Predicated region
    $region50: #{_forward_padded.1} parent=1 // pred_check
      _
    $region51: #{_forward_padded.1} parent=1 // pred_check_branch
      %103 = sbr.rel (0) target = $region53
    $region52: #{_forward_padded.1} parent=1 // pred_region
      %104 = dma.done [#allocation9], 3584
    $region53: #{_forward_padded.1} parent=1 // pred_fallthru
      _
    // Predicated region
    $region54: #{_forward_padded.1} parent=1 // pred_check
      _
    $region55: #{_forward_padded.1} parent=1 // pred_check_branch
      %106 = sbr.rel (0) target = $region57
    $region56: #{_forward_padded.1} parent=1 // pred_region
      %107 = dma.done [#allocation9], 8192
    $region57: #{_forward_padded.1} parent=1 // pred_fallthru
      _
    // Predicated region
    $region58: #{_forward_padded.1} parent=1 // pred_check
      _
    $region59: #{_forward_padded.1} parent=1 // pred_check_branch
      %109 = sbr.rel (0) target = $region61
    $region60: #{_forward_padded.1} parent=1 // pred_region
      %110 = dma.done [#allocation12], 2048
    $region61: #{_forward_padded.1} parent=1 // pred_fallthru
      _
    %v112 = vld [vmem:[#allocation2] sm:$0xf]
    %v113 = vld [vmem:[#allocation5] sm:$0xf]
    %v114 = vld [vmem:[#allocation7] sm:$0xff]
    %v115 = vld [vmem:[#allocation7 + $0x8] sm:$0xff]
    %v116 = vld [vmem:[#allocation7 + $0x10] sm:$0xff]
    %v117 = vld [vmem:[#allocation7 + $0x18] sm:$0xff]
    %v118 = vld [vmem:[#allocation8] sm:$0xff]
    %v119 = vld [vmem:[#allocation8 + $0x8] sm:$0xff]
    %v120 = vld [vmem:[#allocation8 + $0x10] sm:$0xff]
    %v121 = vld [vmem:[#allocation8 + $0x18] sm:$0xff]
    %v122 = vld [vmem:[#allocation8 + $0x20] sm:$0xff]
    %v123 = vld [vmem:[#allocation8 + $0x28] sm:$0xff]
    %v124 = vld [vmem:[#allocation8 + $0x30] sm:$0xff]
    %v125 = vld [vmem:[#allocation8 + $0x38] sm:$0xff]
    %v126 = vld [vmem:[#allocation8 + $0x40] sm:$0xff]
    %v127 = vld [vmem:[#allocation8 + $0x48] sm:$0xff]
    %v128 = vld [vmem:[#allocation8 + $0x50] sm:$0xff]
    %v129 = vld [vmem:[#allocation8 + $0x58] sm:$0xff]
    %v130 = vld [vmem:[#allocation8 + $0x60] sm:$0xff]
    %v131 = vld [vmem:[#allocation8 + $0x68] sm:$0xff]
    %v132 = vld [vmem:[#allocation8 + $0x70] sm:$0xff]
    %v133 = vld [vmem:[#allocation8 + $0x78] sm:$0xff]
    %v134 = vld [vmem:[#allocation8 + $0x80] sm:$0xff]
    %v135 = vld [vmem:[#allocation8 + $0x88] sm:$0xff]
    %v136 = vld [vmem:[#allocation8 + $0x90] sm:$0xff]
    %v137 = vld [vmem:[#allocation8 + $0x98] sm:$0xff]
    %v138 = vld [vmem:[#allocation8 + $0xa0] sm:$0xff]
    %v139 = vld [vmem:[#allocation8 + $0xa8] sm:$0xff]
    %v140 = vld [vmem:[#allocation8 + $0xb0] sm:$0xff]
    %v141 = vld [vmem:[#allocation8 + $0xb8] sm:$0xff]
    %v142 = vld [vmem:[#allocation8 + $0xc0] sm:$0xff]
    %v143 = vld [vmem:[#allocation8 + $0xc8] sm:$0xff]
    %v144 = vld [vmem:[#allocation8 + $0xd0] sm:$0xff]
    %v145 = vld [vmem:[#allocation8 + $0xd8] sm:$0xff]
    %v174 = vunpack.c.l.b16 %v118
    %v175 = vunpack.c.h.b16 %v118
    %v176 = vunpack.c.l.b16 %v119
    %v177 = vunpack.c.h.b16 %v119
    %v178 = vunpack.c.l.b16 %v120
    %v179 = vunpack.c.h.b16 %v120
    %v180 = vunpack.c.l.b16 %v121
    %v181 = vunpack.c.h.b16 %v121
    %v182 = vunpack.c.l.b16 %v122
    %v183 = vunpack.c.h.b16 %v122
    %v184 = vunpack.c.l.b16 %v123
    %v185 = vunpack.c.h.b16 %v123
    %v186 = vunpack.c.l.b16 %v124
    %v187 = vunpack.c.h.b16 %v124
    %v188 = vunpack.c.l.b16 %v125
    %v189 = vunpack.c.h.b16 %v125
    %v190 = vunpack.c.l.b16 %v126
    %v191 = vunpack.c.h.b16 %v126
    %v192 = vunpack.c.l.b16 %v127
    %v193 = vunpack.c.h.b16 %v127
    %v194 = vunpack.c.l.b16 %v128
    %v195 = vunpack.c.h.b16 %v128
    %v196 = vunpack.c.l.b16 %v129
    %v197 = vunpack.c.h.b16 %v129
    %v198 = vunpack.c.l.b16 %v130
    %v199 = vunpack.c.h.b16 %v130
    %v200 = vunpack.c.l.b16 %v131
    %v201 = vunpack.c.h.b16 %v131
    %v202 = vunpack.c.l.b16 %v132
    %v203 = vunpack.c.h.b16 %v132
    %v204 = vunpack.c.l.b16 %v133
    %v205 = vunpack.c.h.b16 %v133
    %v206 = vunpack.c.l.b16 %v134
    %v207 = vunpack.c.h.b16 %v134
    %v208 = vunpack.c.l.b16 %v135
    %v209 = vunpack.c.h.b16 %v135
    %v210 = vunpack.c.l.b16 %v136
    %v211 = vunpack.c.h.b16 %v136
    %v212 = vunpack.c.l.b16 %v137
    %v213 = vunpack.c.h.b16 %v137
    %v214 = vunpack.c.l.b16 %v138
    %v215 = vunpack.c.h.b16 %v138
    %v216 = vunpack.c.l.b16 %v139
    %v217 = vunpack.c.h.b16 %v139
    %v218 = vunpack.c.l.b16 %v140
    %v219 = vunpack.c.h.b16 %v140
    %v220 = vunpack.c.l.b16 %v141
    %v221 = vunpack.c.h.b16 %v141
    %v222 = vunpack.c.l.b16 %v142
    %v223 = vunpack.c.h.b16 %v142
    %v224 = vunpack.c.l.b16 %v143
    %v225 = vunpack.c.h.b16 %v143
    %v226 = vunpack.c.l.b16 %v144
    %v227 = vunpack.c.h.b16 %v144
    %v228 = vunpack.c.l.b16 %v145
    %v229 = vunpack.c.h.b16 %v145
    %v230 = vpack.c.b16 %v178, %v174
    %v231 = vpack.c.b16 %v179, %v175
    %v232 = vpack.c.b16 %v180, %v176
    %v233 = vpack.c.b16 %v181, %v177
    %v234 = vpack.c.b16 %v186, %v182
    %v235 = vpack.c.b16 %v187, %v183
    %v236 = vpack.c.b16 %v188, %v184
    %v237 = vpack.c.b16 %v189, %v185
    %v238 = vpack.c.b16 %v194, %v190
    %v239 = vpack.c.b16 %v195, %v191
    %v240 = vpack.c.b16 %v196, %v192
    %v241 = vpack.c.b16 %v197, %v193
    %v242 = vpack.c.b16 %v202, %v198
    %v243 = vpack.c.b16 %v203, %v199
    %v244 = vpack.c.b16 %v204, %v200
    %v245 = vpack.c.b16 %v205, %v201
    %v246 = vpack.c.b16 %v210, %v206
    %v247 = vpack.c.b16 %v211, %v207
    %v248 = vpack.c.b16 %v212, %v208
    %v249 = vpack.c.b16 %v213, %v209
    %v250 = vpack.c.b16 %v218, %v214
    %v251 = vpack.c.b16 %v219, %v215
    %v252 = vpack.c.b16 %v220, %v216
    %v253 = vpack.c.b16 %v221, %v217
    %v254 = vpack.c.b16 %v226, %v222
    %v255 = vpack.c.b16 %v227, %v223
    %v256 = vpack.c.b16 %v228, %v224
    %v257 = vpack.c.b16 %v229, %v225
    %vm286 = vcmask 916480
    %v288 = vsel %vm286, %v113, 0
    %290 = vmatprep.subr.bf16.mxu0 %v231
    %291 = vmatpush1.bf16.msra.mxu0 %v230
    %292 = vmatprep.subr.bf16.mxu0 %v235
    %293 = vmatpush1.bf16.msra.mxu0 %v234
    %294 = vmatprep.subr.bf16.mxu0 %v239
    %295 = vmatpush1.bf16.msra.mxu0 %v238
    %296 = vmatprep.subr.bf16.mxu0 %v243
    %297 = vmatpush1.bf16.msra.mxu0 %v242
    %298 = vmatprep.subr.bf16.mxu0 %v247
    %299 = vmatpush1.bf16.msra.mxu0 %v246
    %300 = vmatprep.subr.bf16.mxu0 %v251
    %301 = vmatpush1.bf16.msra.mxu0 %v250
    %302 = vmatprep.subr.bf16.mxu0 %v255
    %303 = vmatpush1.bf16.msra.mxu0 %v254
    %304 = vmatprep.subr.bf16.mxu0 0
    %305 = vmatpush1.bf16.msra.mxu0 0
    %306 = vmatprep.subr.bf16.mxu0 0
    %307 = vmatpush1.bf16.msra.mxu0 0
    %308 = vmatprep.subr.bf16.mxu0 0
    %309 = vmatpush1.bf16.msra.mxu0 0
    %310 = vmatprep.subr.bf16.mxu0 0
    %311 = vmatpush1.bf16.msra.mxu0 0
    %312 = vmatprep.subr.bf16.mxu0 0
    %313 = vmatpush1.bf16.msra.mxu0 0
    %314 = vmatprep.subr.bf16.mxu0 0
    %315 = vmatpush1.bf16.msra.mxu0 0
    %316 = vmatprep.subr.bf16.mxu0 0
    %317 = vmatpush1.bf16.msra.mxu0 0
    %318 = vmatprep.subr.bf16.mxu0 0
    %319 = vmatpush1.bf16.msra.mxu0 0
    %320 = vmatprep.subr.bf16.mxu0 0
    %321 = vmatpush1.bf16.msra.mxu0 0
    %322 = vmatprep.mubr.bf16.mxu0 0
    %323 = vmatmul.mubr.bf16.gmra.mrb[0].mxu0 %v288
    %v324 = vpop.f32.mrb[0].mxu0
    %v325 = vadd.f32 0.0, %v324
    %v326 = vpop.f32.mrb[0].mxu0
    %v327 = vadd.f32 0.0, %v326
    %v328 = vpop.f32.mrb[0].mxu0
    %v329 = vpop.f32.mrb[0].mxu0
    %330 = vdwg.mxu0
    %331 = vmatprep.subr.bf16.mxu0 %v233
    %332 = vmatpush1.bf16.msra.mxu0 %v232
    %333 = vmatprep.subr.bf16.mxu0 %v237
    %334 = vmatpush1.bf16.msra.mxu0 %v236
    %335 = vmatprep.subr.bf16.mxu0 %v241
    %336 = vmatpush1.bf16.msra.mxu0 %v240
    %337 = vmatprep.subr.bf16.mxu0 %v245
    %338 = vmatpush1.bf16.msra.mxu0 %v244
    %339 = vmatprep.subr.bf16.mxu0 %v249
    %340 = vmatpush1.bf16.msra.mxu0 %v248
    %341 = vmatprep.subr.bf16.mxu0 %v253
    %342 = vmatpush1.bf16.msra.mxu0 %v252
    %343 = vmatprep.subr.bf16.mxu0 %v257
    %344 = vmatpush1.bf16.msra.mxu0 %v256
    %345 = vmatprep.subr.bf16.mxu0 0
    %346 = vmatpush1.bf16.msra.mxu0 0
    %347 = vmatprep.subr.bf16.mxu0 0
    %348 = vmatpush1.bf16.msra.mxu0 0
    %349 = vmatprep.subr.bf16.mxu0 0
    %350 = vmatpush1.bf16.msra.mxu0 0
    %351 = vmatprep.subr.bf16.mxu0 0
    %352 = vmatpush1.bf16.msra.mxu0 0
    %353 = vmatprep.subr.bf16.mxu0 0
    %354 = vmatpush1.bf16.msra.mxu0 0
    %355 = vmatprep.subr.bf16.mxu0 0
    %356 = vmatpush1.bf16.msra.mxu0 0
    %357 = vmatprep.subr.bf16.mxu0 0
    %358 = vmatpush1.bf16.msra.mxu0 0
    %359 = vmatprep.subr.bf16.mxu0 0
    %360 = vmatpush1.bf16.msra.mxu0 0
    %361 = vmatprep.subr.bf16.mxu0 0
    %362 = vmatpush1.bf16.msra.mxu0 0
    %363 = vmatprep.mubr.bf16.mxu0 0
    %364 = vmatmul.mubr.bf16.gmra.mrb[0].mxu0 %v288
    %v365 = vpop.f32.mrb[0].mxu0
    %v366 = vadd.f32 0.0, %v365
    %v367 = vpop.f32.mrb[0].mxu0
    %v368 = vadd.f32 0.0, %v367
    %v369 = vpop.f32.mrb[0].mxu0
    %v370 = vpop.f32.mrb[0].mxu0
    %371 = vdwg.mxu0
    %v376 = vunpack.c.l.b16 %v114
    %v377 = vunpack.c.h.b16 %v114
    %v378 = vunpack.c.l.b16 %v115
    %v379 = vunpack.c.h.b16 %v115
    %v380 = vunpack.c.l.b16 %v116
    %v381 = vunpack.c.h.b16 %v116
    %v382 = vunpack.c.l.b16 %v117
    %v383 = vunpack.c.h.b16 %v117
    %v384 = vpack.c.b16 %v380, %v376
    %v385 = vpack.c.b16 %v381, %v377
    %v386 = vpack.c.b16 %v382, %v378
    %v387 = vpack.c.b16 %v383, %v379
    %vm392 = vcmask 130048
    %v394 = vsel %vm392, %v112, 0
    %396 = vmatprep.subr.bf16.mxu0 %v385
    %397 = vmatpush1.bf16.msra.mxu0 %v384
    %398 = vmatprep.subr.bf16.mxu0 0
    %399 = vmatpush1.bf16.msra.mxu0 0
    %400 = vmatprep.subr.bf16.mxu0 0
    %401 = vmatpush1.bf16.msra.mxu0 0
    %402 = vmatprep.subr.bf16.mxu0 0
    %403 = vmatpush1.bf16.msra.mxu0 0
    %404 = vmatprep.subr.bf16.mxu0 0
    %405 = vmatpush1.bf16.msra.mxu0 0
    %406 = vmatprep.subr.bf16.mxu0 0
    %407 = vmatpush1.bf16.msra.mxu0 0
    %408 = vmatprep.subr.bf16.mxu0 0
    %409 = vmatpush1.bf16.msra.mxu0 0
    %410 = vmatprep.subr.bf16.mxu0 0
    %411 = vmatpush1.bf16.msra.mxu0 0
    %412 = vmatprep.subr.bf16.mxu0 0
    %413 = vmatpush1.bf16.msra.mxu0 0
    %414 = vmatprep.subr.bf16.mxu0 0
    %415 = vmatpush1.bf16.msra.mxu0 0
    %416 = vmatprep.subr.bf16.mxu0 0
    %417 = vmatpush1.bf16.msra.mxu0 0
    %418 = vmatprep.subr.bf16.mxu0 0
    %419 = vmatpush1.bf16.msra.mxu0 0
    %420 = vmatprep.subr.bf16.mxu0 0
    %421 = vmatpush1.bf16.msra.mxu0 0
    %422 = vmatprep.subr.bf16.mxu0 0
    %423 = vmatpush1.bf16.msra.mxu0 0
    %424 = vmatprep.subr.bf16.mxu0 0
    %425 = vmatpush1.bf16.msra.mxu0 0
    %426 = vmatprep.subr.bf16.mxu0 0
    %427 = vmatpush1.bf16.msra.mxu0 0
    %428 = vmatprep.mubr.bf16.mxu0 0
    %429 = vmatmul.mubr.bf16.gmra.mrb[0].mxu0 %v394
    %v430 = vpop.f32.mrb[0].mxu0
    %v431 = vadd.f32 %v325, %v430
    %v432 = vpop.f32.mrb[0].mxu0
    %v433 = vadd.f32 %v327, %v432
    %v434 = vpop.f32.mrb[0].mxu0
    %v435 = vpop.f32.mrb[0].mxu0
    %436 = vdwg.mxu0
    %437 = vmatprep.subr.bf16.mxu0 %v387
    %438 = vmatpush1.bf16.msra.mxu0 %v386
    %439 = vmatprep.subr.bf16.mxu0 0
    %440 = vmatpush1.bf16.msra.mxu0 0
    %441 = vmatprep.subr.bf16.mxu0 0
    %442 = vmatpush1.bf16.msra.mxu0 0
    %443 = vmatprep.subr.bf16.mxu0 0
    %444 = vmatpush1.bf16.msra.mxu0 0
    %445 = vmatprep.subr.bf16.mxu0 0
    %446 = vmatpush1.bf16.msra.mxu0 0
    %447 = vmatprep.subr.bf16.mxu0 0
    %448 = vmatpush1.bf16.msra.mxu0 0
    %449 = vmatprep.subr.bf16.mxu0 0
    %450 = vmatpush1.bf16.msra.mxu0 0
    %451 = vmatprep.subr.bf16.mxu0 0
    %452 = vmatpush1.bf16.msra.mxu0 0
    %453 = vmatprep.subr.bf16.mxu0 0
    %454 = vmatpush1.bf16.msra.mxu0 0
    %455 = vmatprep.subr.bf16.mxu0 0
    %456 = vmatpush1.bf16.msra.mxu0 0
    %457 = vmatprep.subr.bf16.mxu0 0
    %458 = vmatpush1.bf16.msra.mxu0 0
    %459 = vmatprep.subr.bf16.mxu0 0
    %460 = vmatpush1.bf16.msra.mxu0 0
    %461 = vmatprep.subr.bf16.mxu0 0
    %462 = vmatpush1.bf16.msra.mxu0 0
    %463 = vmatprep.subr.bf16.mxu0 0
    %464 = vmatpush1.bf16.msra.mxu0 0
    %465 = vmatprep.subr.bf16.mxu0 0
    %466 = vmatpush1.bf16.msra.mxu0 0
    %467 = vmatprep.subr.bf16.mxu0 0
    %468 = vmatpush1.bf16.msra.mxu0 0
    %469 = vmatprep.mubr.bf16.mxu0 0
    %470 = vmatmul.mubr.bf16.gmra.mrb[0].mxu0 %v394
    %v471 = vpop.f32.mrb[0].mxu0
    %v472 = vadd.f32 %v366, %v471
    %v473 = vpop.f32.mrb[0].mxu0
    %v474 = vadd.f32 %v368, %v473
    %v475 = vpop.f32.mrb[0].mxu0
    %v476 = vpop.f32.mrb[0].mxu0
    %477 = vdwg.mxu0
    %v478 = vld [vmem:[%s4] sm:$0xf]
    %v480 = vlaneseq
    %v481 = vshrl.u32 %v480, 7
    %v482 = vsub.s32 0, %v481
    %v483 = vrot.slane %v478, %v482
    %v484 = vlaneseq
    %v485 = vshrl.u32 %v484, 7
    %v486 = vsub.s32 1, %v485
    %v487 = vrot.slane %v478, %v486
    %v488 = vlaneseq
    %v489 = vshrl.u32 %v488, 7
    %v490 = vsub.s32 2, %v489
    %v491 = vrot.slane %v478, %v490
    %v492 = vlaneseq
    %v493 = vshrl.u32 %v492, 7
    %v494 = vsub.s32 3, %v493
    %v495 = vrot.slane %v478, %v494
    %v500 = vadd.f32 %v431, %v483
    %v501 = vadd.f32 %v433, %v487
    %v502 = vadd.f32 %v472, %v491
    %v503 = vadd.f32 %v474, %v495
    %v504 = vmax.f32 %v500, 0.0
    %v505 = vmax.f32 %v501, 0.0
    %v506 = vmax.f32 %v502, 0.0
    %v507 = vmax.f32 %v503, 0.0
    %v508 = vpack.c.bf16 %v504, %v504
    %v509 = vpack.c.bf16 %v505, %v505
    %v510 = vpack.c.bf16 %v506, %v506
    %v511 = vpack.c.bf16 %v507, %v507
    %v512 = vld [vmem:[#allocation10] sm:$0xff]
    %v513 = vld [vmem:[#allocation10 + $0x8] sm:$0xff]
    %v514 = vld [vmem:[#allocation10 + $0x10] sm:$0xff]
    %v515 = vld [vmem:[#allocation10 + $0x18] sm:$0xff]
    %v516 = vld [vmem:[#allocation10 + $0x20] sm:$0xff]
    %v517 = vld [vmem:[#allocation10 + $0x28] sm:$0xff]
    %v518 = vld [vmem:[#allocation10 + $0x30] sm:$0xff]
    %v519 = vld [vmem:[#allocation10 + $0x38] sm:$0xff]
    %v520 = vld [vmem:[#allocation10 + $0x40] sm:$0xff]
    %v521 = vld [vmem:[#allocation10 + $0x48] sm:$0xff]
    %v522 = vld [vmem:[#allocation10 + $0x50] sm:$0xff]
    %v523 = vld [vmem:[#allocation10 + $0x58] sm:$0xff]
    %v524 = vld [vmem:[#allocation10 + $0x60] sm:$0xff]
    %v525 = vld [vmem:[#allocation10 + $0x68] sm:$0xff]
    %v526 = vld [vmem:[#allocation10 + $0x70] sm:$0xff]
    %v527 = vld [vmem:[#allocation10 + $0x78] sm:$0xff]
    %v528 = vld [vmem:[#allocation10 + $0x80] sm:$0xff]
    %v529 = vld [vmem:[#allocation10 + $0x88] sm:$0xff]
    %v530 = vld [vmem:[#allocation10 + $0x90] sm:$0xff]
    %v531 = vld [vmem:[#allocation10 + $0x98] sm:$0xff]
    %v532 = vld [vmem:[#allocation10 + $0xa0] sm:$0xff]
    %v533 = vld [vmem:[#allocation10 + $0xa8] sm:$0xff]
    %v534 = vld [vmem:[#allocation10 + $0xb0] sm:$0xff]
    %v535 = vld [vmem:[#allocation10 + $0xb8] sm:$0xff]
    %v536 = vld [vmem:[#allocation10 + $0xc0] sm:$0xff]
    %v537 = vld [vmem:[#allocation10 + $0xc8] sm:$0xff]
    %v538 = vld [vmem:[#allocation10 + $0xd0] sm:$0xff]
    %v539 = vld [vmem:[#allocation10 + $0xd8] sm:$0xff]
    %v540 = vld [vmem:[#allocation10 + $0xe0] sm:$0xff]
    %v541 = vld [vmem:[#allocation10 + $0xe8] sm:$0xff]
    %v542 = vld [vmem:[#allocation10 + $0xf0] sm:$0xff]
    %v543 = vld [vmem:[#allocation10 + $0xf8] sm:$0xff]
    %v544 = vld [vmem:[#allocation10 + $0x100] sm:$0xff]
    %v545 = vld [vmem:[#allocation10 + $0x108] sm:$0xff]
    %v546 = vld [vmem:[#allocation10 + $0x110] sm:$0xff]
    %v547 = vld [vmem:[#allocation10 + $0x118] sm:$0xff]
    %v548 = vld [vmem:[#allocation10 + $0x120] sm:$0xff]
    %v549 = vld [vmem:[#allocation10 + $0x128] sm:$0xff]
    %v550 = vld [vmem:[#allocation10 + $0x130] sm:$0xff]
    %v551 = vld [vmem:[#allocation10 + $0x138] sm:$0xff]
    %v552 = vld [vmem:[#allocation10 + $0x140] sm:$0xff]
    %v553 = vld [vmem:[#allocation10 + $0x148] sm:$0xff]
    %v554 = vld [vmem:[#allocation10 + $0x150] sm:$0xff]
    %v555 = vld [vmem:[#allocation10 + $0x158] sm:$0xff]
    %v556 = vld [vmem:[#allocation10 + $0x160] sm:$0xff]
    %v557 = vld [vmem:[#allocation10 + $0x168] sm:$0xff]
    %v558 = vld [vmem:[#allocation10 + $0x170] sm:$0xff]
    %v559 = vld [vmem:[#allocation10 + $0x178] sm:$0xff]
    %v560 = vld [vmem:[#allocation10 + $0x180] sm:$0xff]
    %v561 = vld [vmem:[#allocation10 + $0x188] sm:$0xff]
    %v562 = vld [vmem:[#allocation10 + $0x190] sm:$0xff]
    %v563 = vld [vmem:[#allocation10 + $0x198] sm:$0xff]
    %v564 = vld [vmem:[#allocation10 + $0x1a0] sm:$0xff]
    %v565 = vld [vmem:[#allocation10 + $0x1a8] sm:$0xff]
    %v566 = vld [vmem:[#allocation10 + $0x1b0] sm:$0xff]
    %v567 = vld [vmem:[#allocation10 + $0x1b8] sm:$0xff]
    %v568 = vld [vmem:[#allocation10 + $0x1c0] sm:$0xff]
    %v569 = vld [vmem:[#allocation10 + $0x1c8] sm:$0xff]
    %v570 = vld [vmem:[#allocation10 + $0x1d0] sm:$0xff]
    %v571 = vld [vmem:[#allocation10 + $0x1d8] sm:$0xff]
    %v572 = vld [vmem:[#allocation10 + $0x1e0] sm:$0xff]
    %v573 = vld [vmem:[#allocation10 + $0x1e8] sm:$0xff]
    %v574 = vld [vmem:[#allocation10 + $0x1f0] sm:$0xff]
    %v575 = vld [vmem:[#allocation10 + $0x1f8] sm:$0xff]
    %v576 = vld [vmem:[%s6] sm:$0x3]
    %v578 = vlaneseq
    %v579 = vshrl.u32 %v578, 7
    %v580 = vsub.s32 0, %v579
    %v581 = vrot.slane %v576, %v580
    %v582 = vlaneseq
    %v583 = vshrl.u32 %v582, 7
    %v584 = vsub.s32 1, %v583
    %v585 = vrot.slane %v576, %v584
    %v652 = vunpack.c.l.b16 %v512
    %v653 = vunpack.c.h.b16 %v512
    %v654 = vunpack.c.l.b16 %v513
    %v655 = vunpack.c.h.b16 %v513
    %v656 = vunpack.c.l.b16 %v514
    %v657 = vunpack.c.h.b16 %v514
    %v658 = vunpack.c.l.b16 %v515
    %v659 = vunpack.c.h.b16 %v515
    %v660 = vunpack.c.l.b16 %v516
    %v661 = vunpack.c.h.b16 %v516
    %v662 = vunpack.c.l.b16 %v517
    %v663 = vunpack.c.h.b16 %v517
    %v664 = vunpack.c.l.b16 %v518
    %v665 = vunpack.c.h.b16 %v518
    %v666 = vunpack.c.l.b16 %v519
    %v667 = vunpack.c.h.b16 %v519
    %v668 = vunpack.c.l.b16 %v520
    %v669 = vunpack.c.h.b16 %v520
    %v670 = vunpack.c.l.b16 %v521
    %v671 = vunpack.c.h.b16 %v521
    %v672 = vunpack.c.l.b16 %v522
    %v673 = vunpack.c.h.b16 %v522
    %v674 = vunpack.c.l.b16 %v523
    %v675 = vunpack.c.h.b16 %v523
    %v676 = vunpack.c.l.b16 %v524
    %v677 = vunpack.c.h.b16 %v524
    %v678 = vunpack.c.l.b16 %v525
    %v679 = vunpack.c.h.b16 %v525
    %v680 = vunpack.c.l.b16 %v526
    %v681 = vunpack.c.h.b16 %v526
    %v682 = vunpack.c.l.b16 %v527
    %v683 = vunpack.c.h.b16 %v527
    %v684 = vunpack.c.l.b16 %v528
    %v685 = vunpack.c.h.b16 %v528
    %v686 = vunpack.c.l.b16 %v529
    %v687 = vunpack.c.h.b16 %v529
    %v688 = vunpack.c.l.b16 %v530
    %v689 = vunpack.c.h.b16 %v530
    %v690 = vunpack.c.l.b16 %v531
    %v691 = vunpack.c.h.b16 %v531
    %v692 = vunpack.c.l.b16 %v532
    %v693 = vunpack.c.h.b16 %v532
    %v694 = vunpack.c.l.b16 %v533
    %v695 = vunpack.c.h.b16 %v533
    %v696 = vunpack.c.l.b16 %v534
    %v697 = vunpack.c.h.b16 %v534
    %v698 = vunpack.c.l.b16 %v535
    %v699 = vunpack.c.h.b16 %v535
    %v700 = vunpack.c.l.b16 %v536
    %v701 = vunpack.c.h.b16 %v536
    %v702 = vunpack.c.l.b16 %v537
    %v703 = vunpack.c.h.b16 %v537
    %v704 = vunpack.c.l.b16 %v538
    %v705 = vunpack.c.h.b16 %v538
    %v706 = vunpack.c.l.b16 %v539
    %v707 = vunpack.c.h.b16 %v539
    %v708 = vunpack.c.l.b16 %v540
    %v709 = vunpack.c.h.b16 %v540
    %v710 = vunpack.c.l.b16 %v541
    %v711 = vunpack.c.h.b16 %v541
    %v712 = vunpack.c.l.b16 %v542
    %v713 = vunpack.c.h.b16 %v542
    %v714 = vunpack.c.l.b16 %v543
    %v715 = vunpack.c.h.b16 %v543
    %v716 = vunpack.c.l.b16 %v544
    %v717 = vunpack.c.h.b16 %v544
    %v718 = vunpack.c.l.b16 %v545
    %v719 = vunpack.c.h.b16 %v545
    %v720 = vunpack.c.l.b16 %v546
    %v721 = vunpack.c.h.b16 %v546
    %v722 = vunpack.c.l.b16 %v547
    %v723 = vunpack.c.h.b16 %v547
    %v724 = vunpack.c.l.b16 %v548
    %v725 = vunpack.c.h.b16 %v548
    %v726 = vunpack.c.l.b16 %v549
    %v727 = vunpack.c.h.b16 %v549
    %v728 = vunpack.c.l.b16 %v550
    %v729 = vunpack.c.h.b16 %v550
    %v730 = vunpack.c.l.b16 %v551
    %v731 = vunpack.c.h.b16 %v551
    %v732 = vunpack.c.l.b16 %v552
    %v733 = vunpack.c.h.b16 %v552
    %v734 = vunpack.c.l.b16 %v553
    %v735 = vunpack.c.h.b16 %v553
    %v736 = vunpack.c.l.b16 %v554
    %v737 = vunpack.c.h.b16 %v554
    %v738 = vunpack.c.l.b16 %v555
    %v739 = vunpack.c.h.b16 %v555
    %v740 = vunpack.c.l.b16 %v556
    %v741 = vunpack.c.h.b16 %v556
    %v742 = vunpack.c.l.b16 %v557
    %v743 = vunpack.c.h.b16 %v557
    %v744 = vunpack.c.l.b16 %v558
    %v745 = vunpack.c.h.b16 %v558
    %v746 = vunpack.c.l.b16 %v559
    %v747 = vunpack.c.h.b16 %v559
    %v748 = vunpack.c.l.b16 %v560
    %v749 = vunpack.c.h.b16 %v560
    %v750 = vunpack.c.l.b16 %v561
    %v751 = vunpack.c.h.b16 %v561
    %v752 = vunpack.c.l.b16 %v562
    %v753 = vunpack.c.h.b16 %v562
    %v754 = vunpack.c.l.b16 %v563
    %v755 = vunpack.c.h.b16 %v563
    %v756 = vunpack.c.l.b16 %v564
    %v757 = vunpack.c.h.b16 %v564
    %v758 = vunpack.c.l.b16 %v565
    %v759 = vunpack.c.h.b16 %v565
    %v760 = vunpack.c.l.b16 %v566
    %v761 = vunpack.c.h.b16 %v566
    %v762 = vunpack.c.l.b16 %v567
    %v763 = vunpack.c.h.b16 %v567
    %v764 = vunpack.c.l.b16 %v568
    %v765 = vunpack.c.h.b16 %v568
    %v766 = vunpack.c.l.b16 %v569
    %v767 = vunpack.c.h.b16 %v569
    %v768 = vunpack.c.l.b16 %v570
    %v769 = vunpack.c.h.b16 %v570
    %v770 = vunpack.c.l.b16 %v571
    %v771 = vunpack.c.h.b16 %v571
    %v772 = vunpack.c.l.b16 %v572
    %v773 = vunpack.c.h.b16 %v572
    %v774 = vunpack.c.l.b16 %v573
    %v775 = vunpack.c.h.b16 %v573
    %v776 = vunpack.c.l.b16 %v574
    %v777 = vunpack.c.h.b16 %v574
    %v778 = vunpack.c.l.b16 %v575
    %v779 = vunpack.c.h.b16 %v575
    %v780 = vpack.c.b16 %v654, %v652
    %v781 = vpack.c.b16 %v655, %v653
    %v782 = vpack.c.b16 %v658, %v656
    %v783 = vpack.c.b16 %v659, %v657
    %v784 = vpack.c.b16 %v662, %v660
    %v785 = vpack.c.b16 %v663, %v661
    %v786 = vpack.c.b16 %v666, %v664
    %v787 = vpack.c.b16 %v667, %v665
    %v788 = vpack.c.b16 %v670, %v668
    %v789 = vpack.c.b16 %v671, %v669
    %v790 = vpack.c.b16 %v674, %v672
    %v791 = vpack.c.b16 %v675, %v673
    %v792 = vpack.c.b16 %v678, %v676
    %v793 = vpack.c.b16 %v679, %v677
    %v794 = vpack.c.b16 %v682, %v680
    %v795 = vpack.c.b16 %v683, %v681
    %v796 = vpack.c.b16 %v686, %v684
    %v797 = vpack.c.b16 %v687, %v685
    %v798 = vpack.c.b16 %v690, %v688
    %v799 = vpack.c.b16 %v691, %v689
    %v800 = vpack.c.b16 %v694, %v692
    %v801 = vpack.c.b16 %v695, %v693
    %v802 = vpack.c.b16 %v698, %v696
    %v803 = vpack.c.b16 %v699, %v697
    %v804 = vpack.c.b16 %v702, %v700
    %v805 = vpack.c.b16 %v703, %v701
    %v806 = vpack.c.b16 %v706, %v704
    %v807 = vpack.c.b16 %v707, %v705
    %v808 = vpack.c.b16 %v710, %v708
    %v809 = vpack.c.b16 %v711, %v709
    %v810 = vpack.c.b16 %v714, %v712
    %v811 = vpack.c.b16 %v715, %v713
    %v812 = vpack.c.b16 %v718, %v716
    %v813 = vpack.c.b16 %v719, %v717
    %v814 = vpack.c.b16 %v722, %v720
    %v815 = vpack.c.b16 %v723, %v721
    %v816 = vpack.c.b16 %v726, %v724
    %v817 = vpack.c.b16 %v727, %v725
    %v818 = vpack.c.b16 %v730, %v728
    %v819 = vpack.c.b16 %v731, %v729
    %v820 = vpack.c.b16 %v734, %v732
    %v821 = vpack.c.b16 %v735, %v733
    %v822 = vpack.c.b16 %v738, %v736
    %v823 = vpack.c.b16 %v739, %v737
    %v824 = vpack.c.b16 %v742, %v740
    %v825 = vpack.c.b16 %v743, %v741
    %v826 = vpack.c.b16 %v746, %v744
    %v827 = vpack.c.b16 %v747, %v745
    %v828 = vpack.c.b16 %v750, %v748
    %v829 = vpack.c.b16 %v751, %v749
    %v830 = vpack.c.b16 %v754, %v752
    %v831 = vpack.c.b16 %v755, %v753
    %v832 = vpack.c.b16 %v758, %v756
    %v833 = vpack.c.b16 %v759, %v757
    %v834 = vpack.c.b16 %v762, %v760
    %v835 = vpack.c.b16 %v763, %v761
    %v836 = vpack.c.b16 %v766, %v764
    %v837 = vpack.c.b16 %v767, %v765
    %v838 = vpack.c.b16 %v770, %v768
    %v839 = vpack.c.b16 %v771, %v769
    %v840 = vpack.c.b16 %v774, %v772
    %v841 = vpack.c.b16 %v775, %v773
    %v842 = vpack.c.b16 %v778, %v776
    %v843 = vpack.c.b16 %v779, %v777
    %908 = vmatprep.subr.bf16.mxu0 %v781
    %909 = vmatpush1.bf16.msra.mxu0 %v780
    %910 = vmatprep.subr.bf16.mxu0 %v783
    %911 = vmatpush1.bf16.msra.mxu0 %v782
    %912 = vmatprep.subr.bf16.mxu0 %v785
    %913 = vmatpush1.bf16.msra.mxu0 %v784
    %914 = vmatprep.subr.bf16.mxu0 %v787
    %915 = vmatpush1.bf16.msra.mxu0 %v786
    %916 = vmatprep.subr.bf16.mxu0 %v789
    %917 = vmatpush1.bf16.msra.mxu0 %v788
    %918 = vmatprep.subr.bf16.mxu0 %v791
    %919 = vmatpush1.bf16.msra.mxu0 %v790
    %920 = vmatprep.subr.bf16.mxu0 %v793
    %921 = vmatpush1.bf16.msra.mxu0 %v792
    %922 = vmatprep.subr.bf16.mxu0 %v795
    %923 = vmatpush1.bf16.msra.mxu0 %v794
    %924 = vmatprep.subr.bf16.mxu0 %v797
    %925 = vmatpush1.bf16.msra.mxu0 %v796
    %926 = vmatprep.subr.bf16.mxu0 %v799
    %927 = vmatpush1.bf16.msra.mxu0 %v798
    %928 = vmatprep.subr.bf16.mxu0 %v801
    %929 = vmatpush1.bf16.msra.mxu0 %v800
    %930 = vmatprep.subr.bf16.mxu0 %v803
    %931 = vmatpush1.bf16.msra.mxu0 %v802
    %932 = vmatprep.subr.bf16.mxu0 %v805
    %933 = vmatpush1.bf16.msra.mxu0 %v804
    %934 = vmatprep.subr.bf16.mxu0 %v807
    %935 = vmatpush1.bf16.msra.mxu0 %v806
    %936 = vmatprep.subr.bf16.mxu0 %v809
    %937 = vmatpush1.bf16.msra.mxu0 %v808
    %938 = vmatprep.subr.bf16.mxu0 %v811
    %939 = vmatpush1.bf16.msra.mxu0 %v810
    %940 = vmatprep.mubr.bf16.mxu0 %v509
    %941 = vmatmul.mubr.bf16.gmra.mrb[0].mxu0 %v508
    %v942 = vpop.f32.mrb[0].mxu0
    %v943 = vadd.f32 %v581, %v942
    %v944 = vpop.f32.mrb[0].mxu0
    %v945 = vadd.f32 %v585, %v944
    %v946 = vpop.f32.mrb[0].mxu0
    %v947 = vpop.f32.mrb[0].mxu0
    %948 = vdwg.mxu0
    %949 = vmatprep.subr.bf16.mxu0 %v813
    %950 = vmatpush1.bf16.msra.mxu0 %v812
    %951 = vmatprep.subr.bf16.mxu0 %v815
    %952 = vmatpush1.bf16.msra.mxu0 %v814
    %953 = vmatprep.subr.bf16.mxu0 %v817
    %954 = vmatpush1.bf16.msra.mxu0 %v816
    %955 = vmatprep.subr.bf16.mxu0 %v819
    %956 = vmatpush1.bf16.msra.mxu0 %v818
    %957 = vmatprep.subr.bf16.mxu0 %v821
    %958 = vmatpush1.bf16.msra.mxu0 %v820
    %959 = vmatprep.subr.bf16.mxu0 %v823
    %960 = vmatpush1.bf16.msra.mxu0 %v822
    %961 = vmatprep.subr.bf16.mxu0 %v825
    %962 = vmatpush1.bf16.msra.mxu0 %v824
    %963 = vmatprep.subr.bf16.mxu0 %v827
    %964 = vmatpush1.bf16.msra.mxu0 %v826
    %965 = vmatprep.subr.bf16.mxu0 %v829
    %966 = vmatpush1.bf16.msra.mxu0 %v828
    %967 = vmatprep.subr.bf16.mxu0 %v831
    %968 = vmatpush1.bf16.msra.mxu0 %v830
    %969 = vmatprep.subr.bf16.mxu0 %v833
    %970 = vmatpush1.bf16.msra.mxu0 %v832
    %971 = vmatprep.subr.bf16.mxu0 %v835
    %972 = vmatpush1.bf16.msra.mxu0 %v834
    %973 = vmatprep.subr.bf16.mxu0 %v837
    %974 = vmatpush1.bf16.msra.mxu0 %v836
    %975 = vmatprep.subr.bf16.mxu0 %v839
    %976 = vmatpush1.bf16.msra.mxu0 %v838
    %977 = vmatprep.subr.bf16.mxu0 %v841
    %978 = vmatpush1.bf16.msra.mxu0 %v840
    %979 = vmatprep.subr.bf16.mxu0 %v843
    %980 = vmatpush1.bf16.msra.mxu0 %v842
    %981 = vmatprep.mubr.bf16.mxu0 %v511
    %982 = vmatmul.mubr.bf16.gmra.mrb[0].mxu0 %v510
    %v983 = vpop.f32.mrb[0].mxu0
    %v984 = vadd.f32 %v943, %v983
    %v985 = vpop.f32.mrb[0].mxu0
    %v986 = vadd.f32 %v945, %v985
    %v987 = vpop.f32.mrb[0].mxu0
    %v988 = vpop.f32.mrb[0].mxu0
    %989 = vdwg.mxu0
    %v990 = vmax.f32 %v984, 0.0
    %v991 = vmax.f32 %v986, 0.0
    %v992 = vpack.c.bf16 %v990, %v990
    %v993 = vpack.c.bf16 %v991, %v991
    %v994 = vld [vmem:[#allocation11] sm:$0xf]
    %v995 = vld [vmem:[#allocation11 + $0x4] sm:$0xf]
    %v996 = vld [vmem:[#allocation11 + $0x8] sm:$0xf]
    %v997 = vld [vmem:[#allocation11 + $0xc] sm:$0xf]
    %v998 = vld [vmem:[#allocation11 + $0x10] sm:$0xf]
    %v999 = vld [vmem:[#allocation11 + $0x14] sm:$0xf]
    %v1000 = vld [vmem:[#allocation11 + $0x18] sm:$0xf]
    %v1001 = vld [vmem:[#allocation11 + $0x1c] sm:$0xf]
    %v1002 = vld [vmem:[#allocation11 + $0x20] sm:$0xf]
    %v1003 = vld [vmem:[#allocation11 + $0x24] sm:$0xf]
    %v1004 = vld [vmem:[#allocation11 + $0x28] sm:$0xf]
    %v1005 = vld [vmem:[#allocation11 + $0x2c] sm:$0xf]
    %v1006 = vld [vmem:[#allocation11 + $0x30] sm:$0xf]
    %v1007 = vld [vmem:[#allocation11 + $0x34] sm:$0xf]
    %v1008 = vld [vmem:[#allocation11 + $0x38] sm:$0xf]
    %v1009 = vld [vmem:[#allocation11 + $0x3c] sm:$0xf]
    %v1010 = vld [vmem:[#allocation11 + $0x40] sm:$0xf]
    %v1011 = vld [vmem:[#allocation11 + $0x44] sm:$0xf]
    %v1012 = vld [vmem:[#allocation11 + $0x48] sm:$0xf]
    %v1013 = vld [vmem:[#allocation11 + $0x4c] sm:$0xf]
    %v1014 = vld [vmem:[#allocation11 + $0x50] sm:$0xf]
    %v1015 = vld [vmem:[#allocation11 + $0x54] sm:$0xf]
    %v1016 = vld [vmem:[#allocation11 + $0x58] sm:$0xf]
    %v1017 = vld [vmem:[#allocation11 + $0x5c] sm:$0xf]
    %v1018 = vld [vmem:[#allocation11 + $0x60] sm:$0xf]
    %v1019 = vld [vmem:[#allocation11 + $0x64] sm:$0xf]
    %v1020 = vld [vmem:[#allocation11 + $0x68] sm:$0xf]
    %v1021 = vld [vmem:[#allocation11 + $0x6c] sm:$0xf]
    %v1022 = vld [vmem:[#allocation11 + $0x70] sm:$0xf]
    %v1023 = vld [vmem:[#allocation11 + $0x74] sm:$0xf]
    %v1024 = vld [vmem:[#allocation11 + $0x78] sm:$0xf]
    %v1025 = vld [vmem:[#allocation11 + $0x7c] sm:$0xf]
    %v1026 = vld [vmem:[%s8] sm:$0x1]
    %v1028 = vlaneseq
    %v1029 = vshrl.u32 %v1028, 7
    %v1030 = vsub.s32 0, %v1029
    %v1031 = vrot.slane %v1026, %v1030
    %v1065 = vunpack.c.l.b16 %v994
    %v1066 = vunpack.c.l.b16 %v995
    %v1067 = vunpack.c.l.b16 %v996
    %v1068 = vunpack.c.l.b16 %v997
    %v1069 = vunpack.c.l.b16 %v998
    %v1070 = vunpack.c.l.b16 %v999
    %v1071 = vunpack.c.l.b16 %v1000
    %v1072 = vunpack.c.l.b16 %v1001
    %v1073 = vunpack.c.l.b16 %v1002
    %v1074 = vunpack.c.l.b16 %v1003
    %v1075 = vunpack.c.l.b16 %v1004
    %v1076 = vunpack.c.l.b16 %v1005
    %v1077 = vunpack.c.l.b16 %v1006
    %v1078 = vunpack.c.l.b16 %v1007
    %v1079 = vunpack.c.l.b16 %v1008
    %v1080 = vunpack.c.l.b16 %v1009
    %v1081 = vunpack.c.l.b16 %v1010
    %v1082 = vunpack.c.l.b16 %v1011
    %v1083 = vunpack.c.l.b16 %v1012
    %v1084 = vunpack.c.l.b16 %v1013
    %v1085 = vunpack.c.l.b16 %v1014
    %v1086 = vunpack.c.l.b16 %v1015
    %v1087 = vunpack.c.l.b16 %v1016
    %v1088 = vunpack.c.l.b16 %v1017
    %v1089 = vunpack.c.l.b16 %v1018
    %v1090 = vunpack.c.l.b16 %v1019
    %v1091 = vunpack.c.l.b16 %v1020
    %v1092 = vunpack.c.l.b16 %v1021
    %v1093 = vunpack.c.l.b16 %v1022
    %v1094 = vunpack.c.l.b16 %v1023
    %v1095 = vunpack.c.l.b16 %v1024
    %v1096 = vunpack.c.l.b16 %v1025
    %v1097 = vpack.c.b16 %v1066, %v1065
    %v1098 = vpack.c.b16 %v1068, %v1067
    %v1099 = vpack.c.b16 %v1070, %v1069
    %v1100 = vpack.c.b16 %v1072, %v1071
    %v1101 = vpack.c.b16 %v1074, %v1073
    %v1102 = vpack.c.b16 %v1076, %v1075
    %v1103 = vpack.c.b16 %v1078, %v1077
    %v1104 = vpack.c.b16 %v1080, %v1079
    %v1105 = vpack.c.b16 %v1082, %v1081
    %v1106 = vpack.c.b16 %v1084, %v1083
    %v1107 = vpack.c.b16 %v1086, %v1085
    %v1108 = vpack.c.b16 %v1088, %v1087
    %v1109 = vpack.c.b16 %v1090, %v1089
    %v1110 = vpack.c.b16 %v1092, %v1091
    %v1111 = vpack.c.b16 %v1094, %v1093
    %v1112 = vpack.c.b16 %v1096, %v1095
    %1129 = vmatprep.subr.bf16.mxu0 0
    %1130 = vmatpush1.bf16.msra.mxu0 %v1097
    %1131 = vmatprep.subr.bf16.mxu0 0
    %1132 = vmatpush1.bf16.msra.mxu0 %v1098
    %1133 = vmatprep.subr.bf16.mxu0 0
    %1134 = vmatpush1.bf16.msra.mxu0 %v1099
    %1135 = vmatprep.subr.bf16.mxu0 0
    %1136 = vmatpush1.bf16.msra.mxu0 %v1100
    %1137 = vmatprep.subr.bf16.mxu0 0
    %1138 = vmatpush1.bf16.msra.mxu0 %v1101
    %1139 = vmatprep.subr.bf16.mxu0 0
    %1140 = vmatpush1.bf16.msra.mxu0 %v1102
    %1141 = vmatprep.subr.bf16.mxu0 0
    %1142 = vmatpush1.bf16.msra.mxu0 %v1103
    %1143 = vmatprep.subr.bf16.mxu0 0
    %1144 = vmatpush1.bf16.msra.mxu0 %v1104
    %1145 = vmatprep.subr.bf16.mxu0 0
    %1146 = vmatpush1.bf16.msra.mxu0 %v1105
    %1147 = vmatprep.subr.bf16.mxu0 0
    %1148 = vmatpush1.bf16.msra.mxu0 %v1106
    %1149 = vmatprep.subr.bf16.mxu0 0
    %1150 = vmatpush1.bf16.msra.mxu0 %v1107
    %1151 = vmatprep.subr.bf16.mxu0 0
    %1152 = vmatpush1.bf16.msra.mxu0 %v1108
    %1153 = vmatprep.subr.bf16.mxu0 0
    %1154 = vmatpush1.bf16.msra.mxu0 %v1109
    %1155 = vmatprep.subr.bf16.mxu0 0
    %1156 = vmatpush1.bf16.msra.mxu0 %v1110
    %1157 = vmatprep.subr.bf16.mxu0 0
    %1158 = vmatpush1.bf16.msra.mxu0 %v1111
    %1159 = vmatprep.subr.bf16.mxu0 0
    %1160 = vmatpush1.bf16.msra.mxu0 %v1112
    %1161 = vmatprep.mubr.bf16.mxu0 %v993
    %1162 = vmatmul.mubr.bf16.gmra.mrb[0].mxu0 %v992
    %v1163 = vpop.f32.mrb[0].mxu0
    %v1164 = vadd.f32 %v1031, %v1163
    %v1165 = vpop.f32.mrb[0].mxu0
    %v1166 = vpop.f32.mrb[0].mxu0
    %v1167 = vpop.f32.mrb[0].mxu0
    %1168 = vdwg.mxu0
    %v1169 = vpack.c.bf16 %v1164, %v1164
    %1170 = vst [vmem:[#allocation13] sm:$0xf] %v1169
    // Predicated region
    $region62: #{_forward_padded.1} parent=1 // pred_check
      _
    $region63: #{_forward_padded.1} parent=1 // pred_check_branch
      %1172 = sbr.rel (0) target = $region65
    $region64: #{_forward_padded.1} parent=1 // pred_region
      %s1174 = ssub.s32 64, 64
      %1175 = vsyncadd [#allocation4], %s1174
      %s1177 = sshll.u32 [#allocation13], 4
      %s1178 = int_to_ptr.vmem [resolvable:$true] %s1177
      %1180 = dma.vmem_to_hbm [thread:$0]  %s1178, 64, %s9, [#allocation4]
    $region65: #{_forward_padded.1} parent=1 // pred_fallthru
      _
    // Predicated region
    $region66: #{_forward_padded.1} parent=1 // pred_check
      _
    $region67: #{_forward_padded.1} parent=1 // pred_check_branch
      %1182 = sbr.rel (0) target = $region69
    $region68: #{_forward_padded.1} parent=1 // pred_region
      %1183 = dma.done [#allocation4], 64
    $region69: #{_forward_padded.1} parent=1 // pred_fallthru
      _
    %1184 = vsyncpa [#allocation3], 1
    %1185 = vsyncpa [#allocation6], 1
    %1186 = vsyncpa [#allocation9], 1
    %1187 = vsyncpa [#allocation12], 1
    %1188 = vsyncpa [#allocation4], 1

</llo_original>
